<compile_context>
chip_gen: v7x
topology: tpu7x:2x2x1
jax: 0.10.0
libtpu: 0.0.40
codegen_flags: <defaults>
</compile_context>

<pallas_src>
import functools

import jax
import jax.numpy as jnp
from jax.experimental import pallas as pl
from jax.experimental.pallas import tpu as pltpu

LANES = 128
SUBLANES = 8
TILE_ROWS_F32 = 4096   # rows per block for 4-byte dtypes; scaled by dtype packing


def _charbonnier_kernel(x_ref, y_ref, o_ref, *, eps2, rows_total, steps):
    c = pl.program_id(0)          # chunk (parallel across TensorCores)
    i = pl.program_id(1)          # sequential reduction step within the chunk

    @pl.when(i == 0)
    def _():
        o_ref[...] = jnp.zeros_like(o_ref)

    block_rows = x_ref.shape[0]
    blk = c * steps + i                                   # logical (un-clamped) block index
    rows_left = jnp.int32(rows_total) - blk * block_rows  # valid rows in this block

    d = x_ref[...].astype(jnp.float32) - y_ref[...].astype(jnp.float32)
    val = jnp.sqrt(d * d + jnp.float32(eps2))             # sqrt sits on the EUP slot (free)

    @pl.when(rows_left >= block_rows)
    def _():
        # Fast path (all but at most one block per chunk): pure VPU adds into the
        # resident (8, 128) accumulator — no mask math at all.
        o_ref[...] += val.reshape(-1, SUBLANES, LANES).sum(axis=0)

    @pl.when(rows_left < block_rows)
    def _():
        # Partial last block, or the clamped redundant block of an odd 2-chunk
        # split (rows_left <= 0 -> contributes exactly 0).  The prefix is
        # granule-aligned, so masking at ROW granularity is exact.
        row_idx = jax.lax.broadcasted_iota(jnp.int32, (block_rows, LANES), 0)
        contrib = jnp.where(row_idx < rows_left, val, jnp.float32(0.0))
        o_ref[...] += contrib.reshape(-1, SUBLANES, LANES).sum(axis=0)


_SINGLE_TC_MARKERS = ("v2", "v3", "v5e", "v5 lite", "v5lite", "v6e", "v6 lite", "v6lite")


def _device_has_two_tensorcores():
    """True on chips where a 'parallel' grid axis can shard work across two
    TensorCores (v4 / v5p megacore, v7x); False on single-TC v5e / v6e."""
    try:
        kind = jax.devices()[0].device_kind.lower()
    except Exception:
        return False
    return not any(m in kind for m in _SINGLE_TC_MARKERS)


def charbonnier_loss(x, y, eps=1e-3):
    assert x.shape == y.shape and x.dtype == y.dtype
    n_real = x.size
    assert 0 < n_real < 2**31

    eps2 = float(eps) * float(eps)

    # Row granularity so a block's sublane dim is legal for the dtype
    # (f32 -> 8 rows, bf16 -> 16 rows, int8/fp8 -> 32 rows).
    packing = max(1, 4 // jnp.dtype(x.dtype).itemsize)
    min_rows = SUBLANES * packing
    granule = min_rows * LANES

    xf = jnp.ravel(x)
    yf = jnp.ravel(y)

    # Kernel consumes the granule-aligned prefix; the short tail is plain JAX.
    n_prefix = (n_real // granule) * granule
    n_tail = n_real - n_prefix

    total = jnp.float32(0.0)

    if n_tail:
        # < granule elements (<= 1023 f32 / 2047 bf16): negligible traffic.
        dt = xf[n_prefix:].astype(jnp.float32) - yf[n_prefix:].astype(jnp.float32)
        total = total + jnp.sum(jnp.sqrt(dt * dt + jnp.float32(eps2)))

    if n_prefix:
        rows = n_prefix // LANES
        if n_prefix == n_real:
            # Aligned (common) case: pure reshape, zero copies.
            x2d = xf.reshape(rows, LANES)
            y2d = yf.reshape(rows, LANES)
        else:
            # Prefix slice (offset 0, contiguous).  At worst a prefix copy that
            # XLA can often elide; strictly cheaper than padding both full arrays.
            x2d = jax.lax.slice(xf, (0,), (n_prefix,)).reshape(rows, LANES)
            y2d = jax.lax.slice(yf, (0,), (n_prefix,)).reshape(rows, LANES)

        # Keep bytes per grid step constant across dtypes (~2 MiB / input / buffer).
        block_rows = min(TILE_ROWS_F32 * packing, rows)
        nblocks = pl.cdiv(rows, block_rows)
        num_chunks = 2 if (_device_has_two_tensorcores() and nblocks >= 2) else 1
        steps = pl.cdiv(nblocks, num_chunks)

        def in_map(c, i):
            # Clamp so the DMA source always lies inside the array; the (at most
            # one) logically out-of-range block is fully masked in-kernel.
            return (jnp.minimum(c * steps + i, nblocks - 1), 0)

        kernel = functools.partial(
            _charbonnier_kernel, eps2=eps2, rows_total=int(rows), steps=int(steps)
        )

        partials = pl.pallas_call(
            kernel,
            out_shape=jax.ShapeDtypeStruct((num_chunks * SUBLANES, LANES), jnp.float32),
            grid_spec=pltpu.PrefetchScalarGridSpec(
                num_scalar_prefetch=0,
                grid=(num_chunks, steps),
                in_specs=[
                    pl.BlockSpec((block_rows, LANES), in_map),
                    pl.BlockSpec((block_rows, LANES), in_map),
                ],
                out_specs=pl.BlockSpec((SUBLANES, LANES), lambda c, i: (c, 0)),
            ),
            compiler_params=pltpu.CompilerParams(
                dimension_semantics=("parallel", "arbitrary"),
            ),
        )(x2d, y2d)

        total = total + jnp.sum(partials)

    # Single cross-lane reduce + mean happen once, in plain JAX.
    return total / jnp.float32(n_real)


if __name__ == "__main__":
    key = jax.random.PRNGKey(0)
    kx, ky = jax.random.split(key)

    def ref_loss(a, b, eps=1e-3):
        d = a.astype(jnp.float32) - b.astype(jnp.float32)
        return jnp.mean(jnp.sqrt(d * d + jnp.float32(eps) * jnp.float32(eps)))

    loss_fn = jax.jit(charbonnier_loss)

    cases = [
        ((2, 4, 16, 16), jnp.float32),    # primary NCHW shape: aligned, single block
        ((3, 3, 7, 5), jnp.float32),      # tiny ragged: pure plain-JAX tail path
        ((2, 3, 37, 41), jnp.float32),    # ragged: kernel prefix + plain-JAX tail
        ((5, 8, 128, 130), jnp.float32),  # multi-block with a partial last block
        ((2, 4, 32, 64), jnp.bfloat16),   # bf16: packing=2 row granularity
    ]
    for shape, dtype in cases:
        xs = jax.random.normal(kx, shape, dtype=jnp.float32).astype(dtype)
        ys = jax.random.normal(ky, shape, dtype=jnp.float32).astype(dtype)
        got = loss_fn(xs, ys)
        jax.block_until_ready(got)
        want = ref_loss(xs, ys)
        assert jnp.allclose(got, want, rtol=1e-4, atol=1e-6), (shape, dtype, got, want)

    print("KERNEL_OK")
</pallas_src>

<mosaic_0001>
module attributes {stable_mosaic.version = 11 : i64} {
  func.func @_charbonnier_kernel(%arg0: i32, %arg1: i32, %arg2: memref<16x128xf32, #tpu.memory_space<vmem>>, %arg3: memref<16x128xf32, #tpu.memory_space<vmem>>, %arg4: memref<8x128xf32, #tpu.memory_space<vmem>>) attributes {dimension_semantics = [#tpu.dimension_semantics<parallel>, #tpu.dimension_semantics<arbitrary>], iteration_bounds = array<i64: 1, 1>, scalar_prefetch = 0 : i64, scratch_operands = 0 : i64, tpu.core_type = #tpu.core_type<tc>, window_params = [{transform_indices = @transform_0, window_bounds = array<i64: 16, 128>}, {transform_indices = @transform_1, window_bounds = array<i64: 16, 128>}, {transform_indices = @transform_2, window_bounds = array<i64: 8, 128>}]} {
    %c0_i32 = arith.constant 0 : i32
    %0 = arith.cmpi eq, %arg1, %c0_i32 : i32
    %1 = arith.extui %0 : i1 to i32
    %c0_i32_0 = arith.constant 0 : i32
    %2 = arith.cmpi ne, %1, %c0_i32_0 : i32
    scf.if %2 {
      %cst_9 = arith.constant 0.000000e+00 : f32
      %20 = vector.broadcast %cst_9 : f32 to vector<8x128xf32>
      %c0_10 = arith.constant 0 : index
      %c0_11 = arith.constant 0 : index
      %21 = vector.load %arg4[%c0_10, %c0_11] : memref<8x128xf32, #tpu.memory_space<vmem>>, vector<8x128xf32>
      tpu.vector_store %arg4[%c0_10, %c0_11], %20 {strides = array<i32>} : memref<8x128xf32, #tpu.memory_space<vmem>>, vector<8x128xf32>,
    } else {
    }
    %c1_i32 = arith.constant 1 : i32
    %3 = arith.muli %arg0, %c1_i32 : i32
    %4 = arith.addi %3, %arg1 : i32
    %c16_i32 = arith.constant 16 : i32
    %5 = arith.muli %4, %c16_i32 : i32
    %c16_i32_1 = arith.constant 16 : i32
    %6 = arith.subi %c16_i32_1, %5 : i32
    %c0 = arith.constant 0 : index
    %c0_2 = arith.constant 0 : index
    %7 = vector.load %arg2[%c0, %c0_2] : memref<16x128xf32, #tpu.memory_space<vmem>>, vector<16x128xf32>
    %c0_3 = arith.constant 0 : index
    %c0_4 = arith.constant 0 : index
    %8 = vector.load %arg3[%c0_3, %c0_4] : memref<16x128xf32, #tpu.memory_space<vmem>>, vector<16x128xf32>
    %9 = arith.subf %7, %8 : vector<16x128xf32>
    %10 = arith.mulf %9, %9 : vector<16x128xf32>
    %cst = arith.constant 9.99999997E-7 : f32
    %11 = vector.broadcast %cst : f32 to vector<16x128xf32>
    %12 = arith.addf %10, %11 : vector<16x128xf32>
    %13 = math.sqrt %12 : vector<16x128xf32>
    %c16_i32_5 = arith.constant 16 : i32
    %14 = arith.cmpi sge, %6, %c16_i32_5 : i32
    %15 = arith.extui %14 : i1 to i32
    %c0_i32_6 = arith.constant 0 : i32
    %16 = arith.cmpi ne, %15, %c0_i32_6 : i32
    scf.if %16 {
      %c0_9 = arith.constant 0 : index
      %c0_10 = arith.constant 0 : index
      %20 = vector.load %arg4[%c0_9, %c0_10] : memref<8x128xf32, #tpu.memory_space<vmem>>, vector<8x128xf32>
      %21 = vector.shape_cast %13 : vector<16x128xf32> to vector<2x8x128xf32>
      %cst_11 = arith.constant dense<0.000000e+00> : vector<8x128xf32>
      %22 = vector.multi_reduction <add>, %21, %cst_11 [0] : vector<2x8x128xf32> to vector<8x128xf32>
      %23 = arith.addf %20, %22 : vector<8x128xf32>
      %c0_12 = arith.constant 0 : index
      %c0_13 = arith.constant 0 : index
      %24 = vector.load %arg4[%c0_12, %c0_13] : memref<8x128xf32, #tpu.memory_space<vmem>>, vector<8x128xf32>
      tpu.vector_store %arg4[%c0_12, %c0_13], %23 {strides = array<i32>} : memref<8x128xf32, #tpu.memory_space<vmem>>, vector<8x128xf32>,
    } else {
    }
    %c16_i32_7 = arith.constant 16 : i32
    %17 = arith.cmpi slt, %6, %c16_i32_7 : i32
    %18 = arith.extui %17 : i1 to i32
    %c0_i32_8 = arith.constant 0 : i32
    %19 = arith.cmpi ne, %18, %c0_i32_8 : i32
    scf.if %19 {
      %20 = tpu.iota {dimensions = array<i32: 0>} : vector<16x128xi32>
      %21 = vector.broadcast %6 : i32 to vector<16x128xi32>
      %22 = arith.cmpi slt, %20, %21 : vector<16x128xi32>
      %cst_9 = arith.constant 0.000000e+00 : f32
      %23 = vector.broadcast %cst_9 : f32 to vector<16x128xf32>
      %24 = arith.select %22, %13, %23 : vector<16x128xi1>, vector<16x128xf32>
      %c0_10 = arith.constant 0 : index
      %c0_11 = arith.constant 0 : index
      %25 = vector.load %arg4[%c0_10, %c0_11] : memref<8x128xf32, #tpu.memory_space<vmem>>, vector<8x128xf32>
      %26 = vector.shape_cast %24 : vector<16x128xf32> to vector<2x8x128xf32>
      %cst_12 = arith.constant dense<0.000000e+00> : vector<8x128xf32>
      %27 = vector.multi_reduction <add>, %26, %cst_12 [0] : vector<2x8x128xf32> to vector<8x128xf32>
      %28 = arith.addf %25, %27 : vector<8x128xf32>
      %c0_13 = arith.constant 0 : index
      %c0_14 = arith.constant 0 : index
      %29 = vector.load %arg4[%c0_13, %c0_14] : memref<8x128xf32, #tpu.memory_space<vmem>>, vector<8x128xf32>
      tpu.vector_store %arg4[%c0_13, %c0_14], %28 {strides = array<i32>} : memref<8x128xf32, #tpu.memory_space<vmem>>, vector<8x128xf32>,
    } else {
    }
    return
  }
  func.func @transform_0(%arg0: i32, %arg1: i32) -> (i32, i32) {
    %c1_i32 = arith.constant 1 : i32
    %0 = arith.muli %arg0, %c1_i32 : i32
    %1 = arith.addi %0, %arg1 : i32
    %c0_i32 = arith.constant 0 : i32
    %2 = arith.minsi %1, %c0_i32 : i32
    %c0_i32_0 = arith.constant 0 : i32
    %c0_i32_1 = arith.constant 0 : i32
    return %2, %c0_i32_0 : i32, i32
  }
  func.func @transform_1(%arg0: i32, %arg1: i32) -> (i32, i32) {
    %c1_i32 = arith.constant 1 : i32
    %0 = arith.muli %arg0, %c1_i32 : i32
    %1 = arith.addi %0, %arg1 : i32
    %c0_i32 = arith.constant 0 : i32
    %2 = arith.minsi %1, %c0_i32 : i32
    %c0_i32_0 = arith.constant 0 : i32
    %c0_i32_1 = arith.constant 0 : i32
    return %2, %c0_i32_0 : i32, i32
  }
  func.func @transform_2(%arg0: i32, %arg1: i32) -> (i32, i32) {
    %c0_i32 = arith.constant 0 : i32
    %c0_i32_0 = arith.constant 0 : i32
    return %arg0, %c0_i32 : i32, i32
  }
}

</mosaic_0001>

<llo_original>
// kernel: charbonnier_loss.1
$region0: #{charbonnier_loss.1}
  #allocation0 [shape = 'u32[]', space=smem, size = 0x4, offset = 0x4, fixed_abs, tag = 'smem constant byte address 0x4 - core index']
  #allocation1 [shape = 'u32[144,128]{1,0:T(1,128)}', space=vmem, size = 0x12000, scoped, tag = 'internal scratch']
  %s0 = inlined_call_operand.vmem [shape: f32[16,128], index: 0, kind: input, shape index: {}]
  %s1 = inlined_call_operand.vmem [shape: f32[16,128], index: 1, kind: input, shape index: {}]
  %s2 = inlined_call_operand.vmem [shape: f32[8,128], index: 2, kind: output, shape index: {}]
  %s3 = sld [smem:[#allocation0]]
  $region30: #{charbonnier_loss.1} parent=0
    _
  %s5 = ssub.s32 1, %s3
  %s6 = scalar_select 0, %s5, %s3
  // Predicated region
  $region2: #{charbonnier_loss.1} parent=0 // pred_check
    _
  $region3: #{charbonnier_loss.1} parent=0 // pred_check_branch
    %8 = sbr.rel (0) target = $region5
  $region4: #{charbonnier_loss.1} parent=0 // pred_region
    %s9 = sadd.s32 0, 0
    %p10 = scmp.lt.s32.totalorder %s9, 0
    %s11 = scalar_select %p10, %s9, 0
    %s12 = smul.u32 2, %s11
    %p13 = scmp.lt.s32.totalorder %s12, 1
    %s14 = scalar_select %p13, %s12, 1
    %s15 = smul.addr %s14, 8
    %s16 = scalar_lea.vmem %s0, %s15
    %s17 = sadd.s32 0, 0
    %p18 = scmp.lt.s32.totalorder %s17, 0
    %s19 = scalar_select %p18, %s17, 0
    %s20 = smul.u32 2, %s19
  $region5: #{charbonnier_loss.1} parent=0 // pred_fallthru
    _
  // Predicated region
  $region6: #{charbonnier_loss.1} parent=0 // pred_check
    _
  $region7: #{charbonnier_loss.1} parent=0 // pred_check_branch
    %22 = sbr.rel (0) target = $region9
  $region8: #{charbonnier_loss.1} parent=0 // pred_region
    %s23 = sadd.s32 0, 0
    %p24 = scmp.lt.s32.totalorder %s23, 0
    %s25 = scalar_select %p24, %s23, 0
    %s26 = smul.u32 2, %s25
    %p27 = scmp.lt.s32.totalorder %s26, 1
    %s28 = scalar_select %p27, %s26, 1
    %s29 = smul.addr %s28, 8
    %s30 = scalar_lea.vmem %s1, %s29
    %s31 = sadd.s32 0, 0
    %p32 = scmp.lt.s32.totalorder %s31, 0
    %s33 = scalar_select %p32, %s31, 0
    %s34 = smul.u32 2, %s33
  $region9: #{charbonnier_loss.1} parent=0 // pred_fallthru
    _
  %s35 = sadd.s32 0, 0
  %p36 = scmp.lt.s32.totalorder %s35, 0
  %s37 = scalar_select %p36, %s35, 0
  %s38 = smul.u32 2, %s37
  %p39 = scmp.lt.s32.totalorder %s38, 1
  %s40 = scalar_select %p39, %s38, 1
  %s41 = smul.addr %s40, 8
  %s42 = scalar_lea.vmem %s0, %s41
  %s43 = sadd.s32 0, 0
  %p44 = scmp.lt.s32.totalorder %s43, 0
  %s45 = scalar_select %p44, %s43, 0
  %s46 = smul.u32 2, %s45
  %p47 = scmp.lt.s32.totalorder %s46, 1
  %s48 = scalar_select %p47, %s46, 1
  %s49 = smul.addr %s48, 8
  %s50 = scalar_lea.vmem %s1, %s49
  %s51 = sadd.s32 0, 0
  %p52 = scmp.lt.s32.totalorder %s51, 0
  %s53 = scalar_select %p52, %s51, 0
  %s54 = smul.u32 2, %s53
  %p55 = scmp.lt.s32.totalorder %s54, 1
  %s56 = scalar_select %p55, %s54, 1
  %s57 = smul.addr %s56, 8
  %s58 = scalar_lea.vmem %s0, %s57
  %s59 = sadd.s32 0, 0
  %p60 = scmp.lt.s32.totalorder %s59, 0
  %s61 = scalar_select %p60, %s59, 0
  %s62 = smul.u32 2, %s61
  %s63 = sadd.s32 0, 0
  %p64 = scmp.lt.s32.totalorder %s63, 0
  %s65 = scalar_select %p64, %s63, 0
  %s66 = smul.u32 2, %s65
  %p67 = scmp.lt.s32.totalorder %s66, 1
  %s68 = scalar_select %p67, %s66, 1
  %s69 = smul.addr %s68, 8
  %s70 = scalar_lea.vmem %s1, %s69
  %s71 = sadd.s32 0, 0
  %p72 = scmp.lt.s32.totalorder %s71, 0
  %s73 = scalar_select %p72, %s71, 0
  %s74 = smul.u32 2, %s73
  %p75 = scmp.eq.s32.totalorder 0, 0
  // Predicated region
  $region10: #{charbonnier_loss.1} parent=0 // pred_check
    %p76 = pneg %p75
  $region11: #{charbonnier_loss.1} parent=0 // pred_check_branch
    %78 = sbr.rel (%p76) target = $region13
  $region12: #{charbonnier_loss.1} parent=0 // pred_region
    %79 = vst [vmem:[%s2] sm:$0xff] 0.0
  $region13: #{charbonnier_loss.1} parent=0 // pred_fallthru
    _
  %s80 = sadd.s32 0, 0
  %s81 = smul.u32 %s80, 16
  %s82 = ssub.s32 16, %s81
  %v83 = vld [vmem:[%s58] sm:$0xff]
  %v84 = vld [vmem:[%s58 + $0x8] sm:$0xff]
  %v85 = vld [vmem:[%s70] sm:$0xff]
  %v86 = vld [vmem:[%s70 + $0x8] sm:$0xff]
  %v87 = vsub.f32 %v83, %v85
  %v88 = vsub.f32 %v84, %v86
  %v89 = vmul.f32 %v87, %v87
  %v90 = vmul.f32 %v88, %v88
  %v91 = vadd.f32 %v89, 1e-06
  %v92 = vadd.f32 %v90, 1e-06
  %v93 = vrsqrt.pop %v91
  %v94 = vmul.f32 %v91, %v93
  %vm95 = vcmp.eq.f32.partialorder %v91, inf
  %v96 = vsel %vm95, %v91, %v94
  %vm97 = vcmp.eq.f32.partialorder %v91, 0.0
  %v98 = vand.u32 %v91, 2147483648
  %v99 = vsel %vm97, %v98, %v96
  %v100 = vrsqrt.pop %v92
  %v101 = vmul.f32 %v92, %v100
  %vm102 = vcmp.eq.f32.partialorder %v92, inf
  %v103 = vsel %vm102, %v92, %v101
  %vm104 = vcmp.eq.f32.partialorder %v92, 0.0
  %v105 = vand.u32 %v92, 2147483648
  %v106 = vsel %vm104, %v105, %v103
  %p107 = scmp.ge.s32.totalorder %s82, 16
  // Predicated region
  $region14: #{charbonnier_loss.1} parent=0 // pred_check
    %p108 = pneg %p107
  $region15: #{charbonnier_loss.1} parent=0 // pred_check_branch
    %110 = sbr.rel (%p108) target = $region17
  $region16: #{charbonnier_loss.1} parent=0 // pred_region
    %v111 = vld [vmem:[%s2] sm:$0xff]
    %v112 = vadd.f32 %v99, %v106
    %v113 = vadd.f32 %v111, %v112
    %114 = vst [vmem:[%s2] sm:$0xff] %v113
  $region17: #{charbonnier_loss.1} parent=0 // pred_fallthru
    _
  %p115 = scmp.lt.s32.totalorder %s82, 16
  // Predicated region
  $region18: #{charbonnier_loss.1} parent=0 // pred_check
    %p116 = pneg %p115
  $region19: #{charbonnier_loss.1} parent=0 // pred_check_branch
    %118 = sbr.rel (%p116) target = $region21
  $region20: #{charbonnier_loss.1} parent=0 // pred_region
    %v119 = vlaneseq
    %v120 = vshrl.u32 %v119, 7
    %v121 = vadd.s32 %v120, 8
    %v122 = vstv %s82
    %vm123 = vcmp.lt.s32.totalorder %v120, %v122
    %vm124 = vcmp.lt.s32.totalorder %v121, %v122
    %v125 = vsel %vm123, %v99, 0.0
    %v126 = vsel %vm124, %v106, 0.0
    %v127 = vld [vmem:[%s2] sm:$0xff]
    %v128 = vadd.f32 %v125, %v126
    %v129 = vadd.f32 %v127, %v128
    %130 = vst [vmem:[%s2] sm:$0xff] %v129
  $region21: #{charbonnier_loss.1} parent=0 // pred_fallthru
    _
  // Predicated region
  $region22: #{charbonnier_loss.1} parent=0 // pred_check
    _
  $region23: #{charbonnier_loss.1} parent=0 // pred_check_branch
    %132 = sbr.rel (0) target = $region25
  $region24: #{charbonnier_loss.1} parent=0 // pred_region
    _
  $region25: #{charbonnier_loss.1} parent=0 // pred_fallthru
    _
  // Predicated region
  $region26: #{charbonnier_loss.1} parent=0 // pred_check
    _
  $region27: #{charbonnier_loss.1} parent=0 // pred_check_branch
    %134 = sbr.rel (0) target = $region29
  $region28: #{charbonnier_loss.1} parent=0 // pred_region
    _
  $region29: #{charbonnier_loss.1} parent=0 // pred_fallthru
    _

</llo_original>
